<compile_context>
chip_gen: v7x
topology: tpu7x:2x2x1
jax: 0.10.0
libtpu: 0.0.40
codegen_flags: <defaults>
</compile_context>

<pallas_src>
import functools

import jax
import jax.numpy as jnp
from jax.experimental import pallas as pl
from jax.experimental.pallas import tpu as pltpu

_PW_EPS = 1e-6  # torch.nn.functional.pairwise_distance default eps


def _contrastive_loss_kernel(o1_ref, o2_ref, lab_ref, out_ref, *, margin, batch, block_b):
    """One grid step: partial loss sum over rows [i*block_b, (i+1)*block_b)."""
    i = pl.program_id(0)

    o1 = o1_ref[...].astype(jnp.float32)            # (TB, D), upcast in-kernel
    o2 = o2_ref[...].astype(jnp.float32)            # (TB, D)

    start = pl.multiple_of(i * block_b, block_b)
    lab = lab_ref[pl.ds(start, block_b), :].astype(jnp.float32)   # (TB, 1), resident block

    diff = o1 - o2 + _PW_EPS                        # eps inside the norm (torch semantics)
    ssq = jnp.sum(diff * diff, axis=-1, keepdims=True)            # (TB, 1) == d**2
    dist = jnp.sqrt(ssq)                            # only the hinge branch needs the sqrt
    hinge = jnp.maximum(margin - dist, 0.0)
    per_row = lab * ssq + (1.0 - lab) * (hinge * hinge)           # (TB, 1)

    # zero rows of a (possibly ragged) last tile that lie beyond the real batch
    row = jax.lax.broadcasted_iota(jnp.int32, per_row.shape, 0) + i * block_b
    per_row = jnp.where(row < batch, per_row, 0.0)

    out_ref[...] = jnp.sum(per_row, keepdims=True)  # (1, 1) per-tile partial sum


def _sublane_multiple(dtype):
    """Sublane packing granularity: 8 for 4-byte, 16 for 2-byte, 32 for 1-byte dtypes."""
    return max(8, 32 // max(1, jnp.dtype(dtype).itemsize))


def _vmem_limit_bytes():
    phys = 64 * 1024 * 1024          # conservative default (v7x per-TC physical VMEM)
    try:
        phys = int(pltpu.get_tpu_info().vmem_capacity_bytes)
    except Exception:
        pass
    # leave headroom for compiler internals: v7x -> 48 MiB, v5e/v6e -> 96 MiB
    return min(phys * 3 // 4, 96 * 1024 * 1024)


def _pick_block_b(batch, feat, itemsize, sub, vmem_limit, resident_bytes):
    """Largest sublane-aligned batch tile s.t. 2 inputs x 2 pipeline buffers fit the budget."""
    usable = vmem_limit - resident_bytes - (2 << 20)      # slack for output/internal scratch
    per_tile_budget = max(0, usable) // 4                  # 2 streamed inputs x 2 buffers
    row_bytes = max(1, feat * itemsize)
    tb = (per_tile_budget // row_bytes) // sub * sub
    if tb >= batch:
        return batch                  # full-extent block is always legal
    if tb <= 0:
        # TODO(synk): add a feature-axis grid dimension (2-D tiling over D with a per-row ssq
        # accumulator) for embeddings too wide for even `sub` rows per tile.
        raise ValueError(
            f"feature dim {feat} too large for VMEM budget {vmem_limit} bytes; "
            "D-tiled variant not implemented")
    return tb


def euclidean_contrastive_loss(output1, output2, label, margin=1.0, block_b=None):
    """Pallas wrapper. output1/output2: (B, D) float, label: (B,) float/int/bool."""
    B, D = output1.shape
    itemsize = output1.dtype.itemsize
    sub = _sublane_multiple(output1.dtype)

    # Floating labels pass through in native dtype (cast in-kernel); bool/int -> f32 (tiny array).
    if jnp.issubdtype(label.dtype, jnp.floating):
        lab2d = label.reshape(B, 1)
    else:
        lab2d = label.reshape(B, 1).astype(jnp.float32)

    vmem_limit = _vmem_limit_bytes()
    resident = (B + 2 * sub) * 4 + 4096          # resident label block + tiny output, over-estimate
    if block_b is None:
        block_b = _pick_block_b(B, D, itemsize, sub, vmem_limit, resident)
    else:
        block_b = B if block_b >= B else max(sub, (block_b // sub) * sub)

    num_tiles = pl.cdiv(B, block_b)
    padded_b = num_tiles * block_b
    if padded_b != B:
        lab2d = jnp.pad(lab2d, ((0, padded_b - B), (0, 0)))   # keep in-kernel label slice in-bounds

    kernel = functools.partial(_contrastive_loss_kernel, margin=float(margin),
                               batch=B, block_b=block_b)

    cost = pl.CostEstimate(
        flops=4 * B * D + 8 * B,
        transcendentals=B,                                    # one sqrt per row
        bytes_accessed=2 * B * D * itemsize + padded_b * lab2d.dtype.itemsize + num_tiles * 4,
    )

    partial = pl.pallas_call(
        kernel,
        out_shape=jax.ShapeDtypeStruct((num_tiles, 1), jnp.float32),
        grid=(num_tiles,),
        in_specs=[
            pl.BlockSpec((block_b, D), lambda i: (i, 0)),     # o1: streamed, native dtype
            pl.BlockSpec((block_b, D), lambda i: (i, 0)),     # o2
            pl.BlockSpec((padded_b, 1), lambda i: (0, 0)),    # label: single resident block
        ],
        out_specs=pl.BlockSpec((1, 1), lambda i: (i, 0)),     # per-tile partial sums
        compiler_params=pltpu.CompilerParams(
            dimension_semantics=("parallel",),                # v7x: shard tiles across both TCs
            vmem_limit_bytes=vmem_limit,
        ),
        cost_estimate=cost,
    )(output1, output2, lab2d)
    # TODO(synk): if an xprof trace shows exposed DMA on v5e/v6e, add pipeline_mode=pl.Buffered(3)
    # on the o1/o2 specs (skipped by default to preserve VMEM headroom on v7x).

    return jnp.sum(partial) / B        # divide by the GLOBAL batch size (padded rows already zeroed)


def _reference(output1, output2, label, margin=1.0):
    # plain-JAX reference of the PyTorch forward
    o1 = output1.astype(jnp.float32)
    o2 = output2.astype(jnp.float32)
    lab = label.astype(jnp.float32)
    d = jnp.sqrt(jnp.sum((o1 - o2 + _PW_EPS) ** 2, axis=-1))
    return jnp.mean(lab * d**2 + (1.0 - lab) * jnp.maximum(margin - d, 0.0) ** 2)


if __name__ == "__main__":
    key = jax.random.PRNGKey(0)
    k1, k2, k3 = jax.random.split(key, 3)

    # small shapes consistent with the module's forward: (B, D) embeddings + (B,) labels
    B, D = 8, 32
    output1 = jax.random.normal(k1, (B, D), dtype=jnp.float32)
    output2 = jax.random.normal(k2, (B, D), dtype=jnp.float32)
    label = jax.random.bernoulli(k3, p=0.5, shape=(B,)).astype(jnp.float32)

    loss = euclidean_contrastive_loss(output1, output2, label, margin=1.0)
    jax.block_until_ready(loss)
    ref = _reference(output1, output2, label, margin=1.0)
    assert jnp.allclose(loss, ref, rtol=1e-5, atol=1e-5), (loss, ref)

    # multi-tile + ragged-last-tile path (exercises masking, resident-label slice, global-B mean)
    B2, D2 = 20, 32
    ka, kb, kc = jax.random.split(jax.random.PRNGKey(0), 3)
    o1 = jax.random.normal(ka, (B2, D2), dtype=jnp.float32)
    o2 = jax.random.normal(kb, (B2, D2), dtype=jnp.float32)
    lb = jax.random.bernoulli(kc, p=0.5, shape=(B2,)).astype(jnp.float32)
    loss2 = euclidean_contrastive_loss(o1, o2, lb, margin=1.0, block_b=8)
    jax.block_until_ready(loss2)
    ref2 = _reference(o1, o2, lb, margin=1.0)
    assert jnp.allclose(loss2, ref2, rtol=1e-5, atol=1e-5), (loss2, ref2)

    # bf16 inputs + integer labels: exercises in-kernel upcast and 16-row sublane rounding
    B3, D3 = 48, 32
    kd, ke, kf = jax.random.split(jax.random.PRNGKey(1), 3)
    o1b = jax.random.normal(kd, (B3, D3), dtype=jnp.float32).astype(jnp.bfloat16)
    o2b = jax.random.normal(ke, (B3, D3), dtype=jnp.float32).astype(jnp.bfloat16)
    lbi = jax.random.bernoulli(kf, p=0.5, shape=(B3,)).astype(jnp.int32)
    loss3 = euclidean_contrastive_loss(o1b, o2b, lbi, margin=1.0, block_b=16)
    jax.block_until_ready(loss3)
    ref3 = _reference(o1b, o2b, lbi, margin=1.0)
    assert jnp.allclose(loss3, ref3, rtol=1e-4, atol=1e-4), (loss3, ref3)

    print("KERNEL_OK")
</pallas_src>

<mosaic_0001>
module attributes {stable_mosaic.version = 11 : i64} {
  func.func @_contrastive_loss_kernel(%arg0: i32, %arg1: memref<8x32xf32, #tpu.memory_space<vmem>>, %arg2: memref<8x32xf32, #tpu.memory_space<vmem>>, %arg3: memref<8x1xf32, #tpu.memory_space<vmem>>, %arg4: memref<1x1xf32, #tpu.memory_space<vmem>>) attributes {dimension_semantics = [#tpu.dimension_semantics<parallel>], iteration_bounds = array<i64: 1>, scalar_prefetch = 0 : i64, scratch_operands = 0 : i64, tpu.core_type = #tpu.core_type<tc>, window_params = [{transform_indices = @transform_0, window_bounds = array<i64: 8, 32>}, {transform_indices = @transform_1, window_bounds = array<i64: 8, 32>}, {pipeline_mode = #tpu.pipeline_mode<synchronous>, transform_indices = @transform_2, window_bounds = array<i64: 8, 1>}, {transform_indices = @transform_3, window_bounds = array<i64: 1, 1>}]} {
    %c0 = arith.constant 0 : index
    %c0_0 = arith.constant 0 : index
    %0 = vector.load %arg1[%c0, %c0_0] : memref<8x32xf32, #tpu.memory_space<vmem>>, vector<8x32xf32>
    %c0_1 = arith.constant 0 : index
    %c0_2 = arith.constant 0 : index
    %1 = vector.load %arg2[%c0_1, %c0_2] : memref<8x32xf32, #tpu.memory_space<vmem>>, vector<8x32xf32>
    %c8_i32 = arith.constant 8 : i32
    %2 = arith.muli %arg0, %c8_i32 : i32
    %3 = tpu.assume_multiple %2, 8 : i32
    %4 = arith.index_cast %3 : i32 to index
    %c0_3 = arith.constant 0 : index
    %5 = vector.load %arg3[%4, %c0_3] : memref<8x1xf32, #tpu.memory_space<vmem>>, vector<8x1xf32>
    %6 = arith.subf %0, %1 : vector<8x32xf32>
    %cst = arith.constant 9.99999997E-7 : f32
    %7 = vector.broadcast %cst : f32 to vector<8x32xf32>
    %8 = arith.addf %6, %7 : vector<8x32xf32>
    %9 = arith.mulf %8, %8 : vector<8x32xf32>
    %cst_4 = arith.constant dense<0.000000e+00> : vector<8xf32>
    %10 = vector.multi_reduction <add>, %9, %cst_4 [1] : vector<8x32xf32> to vector<8xf32>
    %11 = vector.shape_cast %10 : vector<8xf32> to vector<8x1xf32>
    %12 = math.sqrt %11 : vector<8x1xf32>
    %cst_5 = arith.constant 1.000000e+00 : f32
    %13 = vector.broadcast %cst_5 : f32 to vector<8x1xf32>
    %14 = arith.subf %13, %12 : vector<8x1xf32>
    %cst_6 = arith.constant 0.000000e+00 : f32
    %15 = vector.broadcast %cst_6 : f32 to vector<8x1xf32>
    %16 = arith.maximumf %14, %15 : vector<8x1xf32>
    %17 = arith.mulf %5, %11 : vector<8x1xf32>
    %cst_7 = arith.constant 1.000000e+00 : f32
    %18 = vector.broadcast %cst_7 : f32 to vector<8x1xf32>
    %19 = arith.subf %18, %5 : vector<8x1xf32>
    %20 = arith.mulf %16, %16 : vector<8x1xf32>
    %21 = arith.mulf %19, %20 : vector<8x1xf32>
    %22 = arith.addf %17, %21 : vector<8x1xf32>
    %23 = tpu.iota {dimensions = array<i32: 0>} : vector<8x1xi32>
    %c8_i32_8 = arith.constant 8 : i32
    %24 = arith.muli %arg0, %c8_i32_8 : i32
    %25 = vector.broadcast %24 : i32 to vector<8x1xi32>
    %26 = arith.addi %23, %25 : vector<8x1xi32>
    %c8_i32_9 = arith.constant 8 : i32
    %27 = vector.broadcast %c8_i32_9 : i32 to vector<8x1xi32>
    %28 = arith.cmpi slt, %26, %27 : vector<8x1xi32>
    %cst_10 = arith.constant 0.000000e+00 : f32
    %29 = vector.broadcast %cst_10 : f32 to vector<8x1xf32>
    %30 = arith.select %28, %22, %29 : vector<8x1xi1>, vector<8x1xf32>
    %31 = vector.shape_cast %30 : vector<8x1xf32> to vector<1x8x1xf32>
    %cst_11 = arith.constant dense<0.000000e+00> : vector<1xf32>
    %32 = vector.multi_reduction <add>, %31, %cst_11 [1, 2] : vector<1x8x1xf32> to vector<1xf32>
    %33 = vector.shape_cast %32 : vector<1xf32> to vector<1x1x1xf32>
    %34 = vector.extract %33[0, 0, 0] : f32 from vector<1x1x1xf32>
    %35 = vector.broadcast %34 : f32 to vector<1x1xf32>
    %c0_12 = arith.constant 0 : index
    %c0_13 = arith.constant 0 : index
    %36 = vector.load %arg4[%c0_12, %c0_13] : memref<1x1xf32, #tpu.memory_space<vmem>>, vector<1x1xf32>
    tpu.vector_store %arg4[%c0_12, %c0_13], %35 {strides = array<i32>} : memref<1x1xf32, #tpu.memory_space<vmem>>, vector<1x1xf32>,
    return
  }
  func.func @transform_0(%arg0: i32) -> (i32, i32) {
    %c0_i32 = arith.constant 0 : i32
    %c0_i32_0 = arith.constant 0 : i32
    return %arg0, %c0_i32 : i32, i32
  }
  func.func @transform_1(%arg0: i32) -> (i32, i32) {
    %c0_i32 = arith.constant 0 : i32
    %c0_i32_0 = arith.constant 0 : i32
    return %arg0, %c0_i32 : i32, i32
  }
  func.func @transform_2(%arg0: i32) -> (i32, i32) {
    %c0_i32 = arith.constant 0 : i32
    %c0_i32_0 = arith.constant 0 : i32
    %c0_i32_1 = arith.constant 0 : i32
    return %c0_i32, %c0_i32_0 : i32, i32
  }
  func.func @transform_3(%arg0: i32) -> (i32, i32) {
    %c0_i32 = arith.constant 0 : i32
    %c0_i32_0 = arith.constant 0 : i32
    return %arg0, %c0_i32 : i32, i32
  }
}

</mosaic_0001>

<llo_original>
// kernel: tpu_custom_call.1
$region0: #{tpu_custom_call.1}
  #allocation0 [shape = 'u32[]', space=smem, size = 0x4, offset = 0x4, fixed_abs, tag = 'smem constant byte address 0x4 - core index']
  #allocation1 [shape = 'u32[144,128]{1,0:T(1,128)}', space=vmem, size = 0x12000, scoped, tag = 'internal scratch']
  %s0 = inlined_call_operand.vmem [shape: f32[8,32], index: 0, kind: input, shape index: {}]
  %s1 = inlined_call_operand.hbm [shape: f32[8,32], index: 1, kind: input, shape index: {}]
  %s2 = inlined_call_operand.vmem [shape: f32[8,1], index: 2, kind: input, shape index: {}]
  %s3 = inlined_call_operand.hbm [shape: f32[1,1], index: 3, kind: output, shape index: {}]
  %s4 = sld [smem:[#allocation0]]
  $region26: #{tpu_custom_call.1} parent=0
    _
  %s6 = ssub.s32 1, %s4
  %s7 = scalar_select 0, %s6, %s4
  $region1: #{tpu_custom_call.1} parent=0
    #allocation2 [shape = 'u8[4096]{0}', space=vmem, size = 0x1000, scoped, tag = 'input window, operand 1, single buffered']
    #allocation3 [shape = 's32[1]{0}', space=sflag, size = 0x4, scoped, tag = 'scoped memory for tpu_custom_call.1']
    #allocation4 [shape = 's32[1]{0}', space=sflag, size = 0x4, scoped, tag = 'scoped memory for tpu_custom_call.1']
    #allocation5 [shape = 'u8[512]{0}', space=vmem, size = 0x400, scoped, tag = 'output window, operand 0, single buffered']
    %8 = vsyncpa [#allocation3], 0
    %9 = vsyncpa [#allocation4], 0
    // Predicated region
    $region2: #{tpu_custom_call.1} parent=1 // pred_check
      _
    $region3: #{tpu_custom_call.1} parent=1 // pred_check_branch
      %11 = sbr.rel (0) target = $region5
    $region4: #{tpu_custom_call.1} parent=1 // pred_region
      _
    $region5: #{tpu_custom_call.1} parent=1 // pred_fallthru
      _
    // Predicated region
    $region6: #{tpu_custom_call.1} parent=1 // pred_check
      _
    $region7: #{tpu_custom_call.1} parent=1 // pred_check_branch
      %13 = sbr.rel (0) target = $region9
    $region8: #{tpu_custom_call.1} parent=1 // pred_region
      %s15 = ssub.s32 128, 128
      %16 = vsyncadd [#allocation3], %s15
      %s18 = sshll.u32 [#allocation2], 4
      %s19 = int_to_ptr.vmem [resolvable:$true] %s18
      %21 = dma.hbm_to_vmem [thread:$0]  %s1, 128, %s19, [#allocation3]
    $region9: #{tpu_custom_call.1} parent=1 // pred_fallthru
      _
    // Predicated region
    $region10: #{tpu_custom_call.1} parent=1 // pred_check
      _
    $region11: #{tpu_custom_call.1} parent=1 // pred_check_branch
      %23 = sbr.rel (0) target = $region13
    $region12: #{tpu_custom_call.1} parent=1 // pred_region
      _
    $region13: #{tpu_custom_call.1} parent=1 // pred_fallthru
      _
    // Predicated region
    $region14: #{tpu_custom_call.1} parent=1 // pred_check
      _
    $region15: #{tpu_custom_call.1} parent=1 // pred_check_branch
      %25 = sbr.rel (0) target = $region17
    $region16: #{tpu_custom_call.1} parent=1 // pred_region
      %26 = dma.done [#allocation3], 128
    $region17: #{tpu_custom_call.1} parent=1 // pred_fallthru
      _
    %v27 = vld [vmem:[%s0] sm:$0xff]
    %v28 = vld [vmem:[#allocation2] sm:$0xff]
    %s29 = smul.u32 0, 8
    %s30 = scalar_lea.vmem %s2, %s29
    %v31 = vld [vmem:[%s30] sm:$0xff]
    %v32 = vsub.f32 %v27, %v28
    %v33 = vadd.f32 %v32, 1e-06
    %v34 = vmul.f32 %v33, %v33
    %vm35 = vcmask 261120
    %v36 = vsel %vm35, %v34, 0.0
    %37 = vadd.xlane.f32.xlu0 %v36
    %v38 = vpop.xlane.xlu0 %37
    %v39 = vrsqrt.pop %v38
    %v40 = vmul.f32 %v38, %v39
    %vm41 = vcmp.eq.f32.partialorder %v38, inf
    %v42 = vsel %vm41, %v38, %v40
    %vm43 = vcmp.eq.f32.partialorder %v38, 0.0
    %v44 = vand.u32 %v38, 2147483648
    %v45 = vsel %vm43, %v44, %v42
    %v46 = vsub.f32 1.0, %v45
    %v47 = vmax.f32 %v46, 0.0
    %v48 = vmul.f32 %v31, %v38
    %v49 = vsub.f32 1.0, %v31
    %v50 = vmul.f32 %v47, %v47
    %v51 = vmul.f32 %v49, %v50
    %v52 = vadd.f32 %v48, %v51
    %v53 = vlaneseq
    %v54 = vshrl.u32 %v53, 7
    %v55 = vstv %s29
    %v56 = vadd.s32 %v54, %v55
    %vm57 = vcmp.lt.s32.totalorder %v56, 8
    %v58 = vsel %vm57, %v52, 0.0
    %vm59 = vcmask 7168
    %v60 = vsel %vm59, %v58, 0.0
    %61 = vadd.xlane.f32.xlu0 %v60
    %v62 = vpop.xlane.xlu0 %61
    %v63 = vrot.slane %v62, 4
    %v64 = vadd.f32 %v62, %v63
    %v65 = vrot.slane %v64, 2
    %v66 = vadd.f32 %v64, %v65
    %v67 = vrot.slane %v66, 1
    %v68 = vadd.f32 %v66, %v67
    %s69 = vtos %v68
    %v70 = vstv %s69
    %vm71 = vcmask 0
    %72 = vst.msk [vmem:[#allocation5] sm:$0x1] %vm71, %v70
    // Predicated region
    $region18: #{tpu_custom_call.1} parent=1 // pred_check
      _
    $region19: #{tpu_custom_call.1} parent=1 // pred_check_branch
      %74 = sbr.rel (0) target = $region21
    $region20: #{tpu_custom_call.1} parent=1 // pred_region
      %s76 = ssub.s32 16, 16
      %77 = vsyncadd [#allocation4], %s76
      %s79 = sshll.u32 [#allocation5], 4
      %s80 = int_to_ptr.vmem [resolvable:$true] %s79
      %82 = dma.vmem_to_hbm [thread:$0]  %s80, 16, %s3, [#allocation4]
    $region21: #{tpu_custom_call.1} parent=1 // pred_fallthru
      _
    // Predicated region
    $region22: #{tpu_custom_call.1} parent=1 // pred_check
      _
    $region23: #{tpu_custom_call.1} parent=1 // pred_check_branch
      %84 = sbr.rel (0) target = $region25
    $region24: #{tpu_custom_call.1} parent=1 // pred_region
      %85 = dma.done [#allocation4], 16
    $region25: #{tpu_custom_call.1} parent=1 // pred_fallthru
      _
    %86 = vsyncpa [#allocation3], 1
    %87 = vsyncpa [#allocation4], 1

</llo_original>
